<compile_context>
chip_gen: v7x
topology: tpu7x:2x2x1
jax: 0.10.0
libtpu: 0.0.40
codegen_flags: <defaults>
</compile_context>

<pallas_src>
import math

import jax
import jax.numpy as jnp
import numpy as np
from jax import lax
from jax.experimental import pallas as pl
from jax.experimental.pallas import tpu as pltpu

NUM_HEADS = 4      # nn.TransformerEncoderLayer(c, 4, ...)
LN_EPS = 1e-5
NEG_INF = float("-inf")


# ---------------------------------------------------------------------------
# In-kernel helpers (traced inside the Pallas kernels, all 2D)
# ---------------------------------------------------------------------------
def _layer_norm(v, g, b):
    """LayerNorm over last dim.  v: (S, C); g, b: (1, C)."""
    mu = jnp.mean(v, axis=-1, keepdims=True)
    d = v - mu
    var = jnp.mean(d * d, axis=-1, keepdims=True)
    return d * lax.rsqrt(var + LN_EPS) * g + b


def _head_logits(x2, maskf, hw1, hb1, hw2_row, hb2):
    """head = Linear(C, C//4) -> ReLU -> Linear(C//4, 1); returns (1, N) logits.

    x2: (N, C); maskf: (1, N); hw1: (C, C4); hb1: (1, C4);
    hw2_row: (1, C4); hb2: (1, 1).
    """
    h = jnp.maximum(
        jnp.dot(x2, hw1, preferred_element_type=jnp.float32) + hb1, 0.0)     # (N, C4)
    logits = jnp.einsum("oc,sc->os", hw2_row, h,
                        preferred_element_type=jnp.float32) + hb2            # (1, N)
    return jnp.where(maskf > 0.5, NEG_INF, logits)


# ---------------------------------------------------------------------------
# Pallas kernels
# ---------------------------------------------------------------------------
def actor_head_kernel(x_ref, mask_ref, hw1_ref, slab_ref, out_ref):
    """use_transformer=False path: head MLP + masked_fill on flattened (B*S, C)."""
    x = x_ref[...].astype(jnp.float32)         # (BS, C)
    maskf = mask_ref[...]                      # (1, BS)
    c4 = hw1_ref.shape[1]
    hb1 = slab_ref[0:1, 0:c4]                  # (1, C4)
    hw2 = slab_ref[1:2, 0:c4]                  # (1, C4)
    hb2 = slab_ref[2:3, 0:1]                   # (1, 1)
    out_ref[...] = _head_logits(x, maskf, hw1_ref[...], hb1, hw2, hb2)


def actor_tx_kernel(f_ref, mask_ref, wqkv_ref, wo3_ref, wf1_ref, wf2_ref,
                    hw1_ref, slab_ref, out_ref):
    """use_transformer=True path: pre-LN TransformerEncoderLayer + head.

    One grid step == one batch element; all math is 2D (S, C)."""
    x = f_ref[0].astype(jnp.float32)           # (S, C)
    maskf = mask_ref[0]                        # (1, S), 1.0 = padded key
    S, C = x.shape
    H = NUM_HEADS
    Dh = C // H
    C4 = C // 4
    scale = 1.0 / math.sqrt(Dh)

    # ---- unpack the packed parameter slab (rows set in _pack_tx_slab) ------
    bq  = slab_ref[0:1,   0:C]
    bk  = slab_ref[1:2,   0:C]
    bv  = slab_ref[2:3,   0:C]
    bo  = slab_ref[3:4,   0:C]
    g1  = slab_ref[4:5,   0:C]
    be1 = slab_ref[5:6,   0:C]
    g2  = slab_ref[6:7,   0:C]
    be2 = slab_ref[7:8,   0:C]
    bf1 = slab_ref[8:9,   0:4 * C]
    bf2 = slab_ref[9:10,  0:C]
    hb1 = slab_ref[10:11, 0:C4]
    hw2 = slab_ref[11:12, 0:C4]
    hb2 = slab_ref[12:13, 0:1]

    # ---- self-attention block (norm_first) ----------------------------------
    a = _layer_norm(x, g1, be1)                                             # (S, C)
    q = jnp.dot(a, wqkv_ref[0], preferred_element_type=jnp.float32) + bq   # (S, C)
    k = jnp.dot(a, wqkv_ref[1], preferred_element_type=jnp.float32) + bk
    v = jnp.dot(a, wqkv_ref[2], preferred_element_type=jnp.float32) + bv

    # additive key-padding bias along the K (lane) axis, hoisted out of the loop
    key_bias = jnp.where(maskf > 0.5, NEG_INF, 0.0)                         # (1, S)

    attn = jnp.zeros((S, C), jnp.float32)
    for h in range(H):                                                       # static unroll
        lo = h * Dh
        qh = q[:, lo:lo + Dh]                                               # (S, Dh)
        kh = k[:, lo:lo + Dh]
        vh = v[:, lo:lo + Dh]
        s = jnp.einsum("qd,kd->qk", qh, kh,
                       preferred_element_type=jnp.float32) * scale          # (S, S)
        s = s + key_bias
        m = jnp.max(s, axis=-1, keepdims=True)
        p = jnp.exp(s - m)
        denom = jnp.sum(p, axis=-1, keepdims=True)
        p = p * pl.reciprocal(denom, approx=True)                           # EUP rcp
        oh = jnp.dot(p, vh, preferred_element_type=jnp.float32)             # (S, Dh)
        # out-projection row-block for this head: no lane concat needed
        attn = attn + jnp.dot(oh, wo3_ref[h],
                              preferred_element_type=jnp.float32)           # (S, C)
    x = x + attn + bo

    # ---- feed-forward block (norm_first) -------------------------------------
    f2 = _layer_norm(x, g2, be2)
    hdn = jnp.maximum(
        jnp.dot(f2, wf1_ref[...], preferred_element_type=jnp.float32) + bf1, 0.0)
    x = x + jnp.dot(hdn, wf2_ref[...], preferred_element_type=jnp.float32) + bf2

    # ---- head + masked_fill ---------------------------------------------------
    out_ref[0] = _head_logits(x, maskf, hw1_ref[...], hb1, hw2, hb2)


# ---------------------------------------------------------------------------
# Parameter packing / init
# ---------------------------------------------------------------------------
def _pack_rows(vecs):
    """Pack a list of 1-D vectors into one (n_rows, max_len) f32 slab."""
    vecs = [jnp.asarray(v, jnp.float32).reshape(-1) for v in vecs]
    width = max(int(v.shape[0]) for v in vecs)
    rows = [jnp.pad(v, (0, width - v.shape[0])) for v in vecs]
    return jnp.stack(rows, axis=0)


def init_actor_params(key, c, use_transformer):
    c4 = c // 4
    ks = jax.random.split(key, 10)

    def linear(k, fan_in, fan_out):
        bound = 1.0 / math.sqrt(fan_in)
        kw, kb = jax.random.split(k)
        w = jax.random.uniform(kw, (fan_in, fan_out), jnp.float32, -bound, bound)
        b = jax.random.uniform(kb, (fan_out,), jnp.float32, -bound, bound)
        return w, b

    p = {}
    p['hw1'], p['hb1'] = linear(ks[0], c, c4)          # head Linear(c, c//4)
    w2, p['hb2'] = linear(ks[1], c4, 1)                # head Linear(c//4, 1)
    p['hw2'] = w2.reshape(c4)                          # stored as (c//4,)
    if use_transformer:
        p['wq'], p['bq'] = linear(ks[2], c, c)
        p['wk'], p['bk'] = linear(ks[3], c, c)
        p['wv'], p['bv'] = linear(ks[4], c, c)
        p['wo'], p['bo'] = linear(ks[5], c, c)
        p['wf1'], p['bf1'] = linear(ks[6], c, 4 * c)
        p['wf2'], p['bf2'] = linear(ks[7], 4 * c, c)
        p['g1'] = jnp.ones((c,), jnp.float32)
        p['be1'] = jnp.zeros((c,), jnp.float32)
        p['g2'] = jnp.ones((c,), jnp.float32)
        p['be2'] = jnp.zeros((c,), jnp.float32)
    return p


def _pack_tx_slab(p):
    return _pack_rows([p['bq'], p['bk'], p['bv'], p['bo'],
                       p['g1'], p['be1'], p['g2'], p['be2'],
                       p['bf1'], p['bf2'],
                       p['hb1'], p['hw2'], p['hb2']])


# ---------------------------------------------------------------------------
# Wrapper
# ---------------------------------------------------------------------------
def _const_spec(shape):
    """Full-array block, constant index_map -> DMA'd once, resident in VMEM."""
    n = len(shape)
    return pl.BlockSpec(tuple(shape), lambda b, _n=n: (0,) * _n)


def actor_forward(f_actions, mask, params, use_transformer=False):
    B, S, C = f_actions.shape

    if not use_transformer:
        # One un-gridded kernel on the flattened batch: lane-dense (1, B*S) output.
        slab = _pack_rows([params['hb1'], params['hw2'], params['hb2']])
        x_flat = f_actions.reshape(B * S, C)
        mask_flat = mask.astype(jnp.float32).reshape(1, B * S)
        out = pl.pallas_call(
            actor_head_kernel,
            out_shape=jax.ShapeDtypeStruct((1, B * S), jnp.float32),
        )(x_flat, mask_flat, params['hw1'], slab)
        return out.reshape(B, S)

    # use_transformer=True: grid over the batch axis.
    H = NUM_HEADS
    mask3 = mask.astype(jnp.float32).reshape(B, 1, S)   # lane-oriented key mask
    wqkv = jnp.stack([params['wq'], params['wk'], params['wv']], axis=0)  # (3,C,C)
    wo3 = params['wo'].reshape(H, C // H, C)                              # (H,Dh,C)
    slab = _pack_tx_slab(params)
    args = (f_actions, mask3, wqkv, wo3, params['wf1'], params['wf2'],
            params['hw1'], slab)

    data_spec = pl.BlockSpec((1, S, C), lambda b: (b, 0, 0))
    mask_spec = pl.BlockSpec((1, 1, S), lambda b: (b, 0, 0))
    out_spec = pl.BlockSpec((1, 1, S), lambda b: (b, 0, 0))
    in_specs = [data_spec, mask_spec] + [_const_spec(a.shape) for a in args[2:]]

    out = pl.pallas_call(
        actor_tx_kernel,
        out_shape=jax.ShapeDtypeStruct((B, 1, S), jnp.float32),
        grid=(B,),
        in_specs=in_specs,
        out_specs=out_spec,
        compiler_params=pltpu.CompilerParams(
            dimension_semantics=("parallel",)),
    )(*args)
    return out.reshape(B, S)


# ---------------------------------------------------------------------------
# Pure-JAX reference (for correctness check)
# ---------------------------------------------------------------------------
def actor_forward_ref(f_actions, mask, params, use_transformer=False):
    x = f_actions.astype(jnp.float32)
    B, S, C = x.shape
    if use_transformer:
        H, Dh = NUM_HEADS, C // NUM_HEADS

        def ln(v, g, b):
            mu = v.mean(-1, keepdims=True)
            var = ((v - mu) ** 2).mean(-1, keepdims=True)
            return (v - mu) / jnp.sqrt(var + LN_EPS) * g + b

        a = ln(x, params['g1'], params['be1'])
        q = (a @ params['wq'] + params['bq']).reshape(B, S, H, Dh).transpose(0, 2, 1, 3)
        k = (a @ params['wk'] + params['bk']).reshape(B, S, H, Dh).transpose(0, 2, 1, 3)
        v = (a @ params['wv'] + params['bv']).reshape(B, S, H, Dh).transpose(0, 2, 1, 3)
        s = jnp.einsum('bhqd,bhkd->bhqk', q, k) / math.sqrt(Dh)
        s = jnp.where(mask[:, None, None, :], -jnp.inf, s)
        p = jax.nn.softmax(s, axis=-1)
        o = jnp.einsum('bhqk,bhkd->bhqd', p, v).transpose(0, 2, 1, 3).reshape(B, S, C)
        x = x + (o @ params['wo'] + params['bo'])
        f2 = ln(x, params['g2'], params['be2'])
        ff = jnp.maximum(f2 @ params['wf1'] + params['bf1'], 0.0) @ params['wf2'] + params['bf2']
        x = x + ff
    h = jnp.maximum(x @ params['hw1'] + params['hb1'], 0.0)
    logits = (h @ params['hw2'].reshape(-1, 1) + params['hb2'])[..., 0]
    return jnp.where(mask, -jnp.inf, logits)


# ---------------------------------------------------------------------------
if __name__ == "__main__":
    B, S, C = 2, 8, 32          # batch, num_actions (seq), channels
    key = jax.random.PRNGKey(0)
    kf, kp = jax.random.split(key)

    f_actions = jax.random.normal(kf, (B, S, C), jnp.float32)
    lengths = jnp.array([S, 5])                        # row 1 has 3 padded actions
    mask = jnp.arange(S)[None, :] >= lengths[:, None]  # (B, S) bool, True = pad

    for use_tx in (False, True):
        params = init_actor_params(kp, C, use_tx)
        out = actor_forward(f_actions, mask, params, use_transformer=use_tx)
        out = jax.block_until_ready(out)
        ref = actor_forward_ref(f_actions, mask, params, use_transformer=use_tx)
        assert out.shape == (B, S) and out.dtype == jnp.float32
        # tolerance covers the EUP approximate-reciprocal softmax normalisation
        assert np.allclose(np.asarray(out), np.asarray(ref), atol=5e-3, rtol=5e-3), \
            f"mismatch (use_transformer={use_tx})"

    print("KERNEL_OK")
</pallas_src>

<mosaic_0001>
module attributes {stable_mosaic.version = 11 : i64} {
  func.func @actor_head_kernel(%arg0: memref<16x32xf32, #tpu.memory_space<vmem>>, %arg1: memref<1x16xf32, #tpu.memory_space<vmem>>, %arg2: memref<32x8xf32, #tpu.memory_space<vmem>>, %arg3: memref<3x8xf32, #tpu.memory_space<vmem>>, %arg4: memref<1x16xf32, #tpu.memory_space<vmem>>) attributes {dimension_semantics = [], scalar_prefetch = 0 : i64, scratch_operands = 0 : i64, tpu.core_type = #tpu.core_type<tc>} {
    %c0 = arith.constant 0 : index
    %c0_0 = arith.constant 0 : index
    %0 = vector.load %arg0[%c0, %c0_0] : memref<16x32xf32, #tpu.memory_space<vmem>>, vector<16x32xf32>
    %c0_1 = arith.constant 0 : index
    %c0_2 = arith.constant 0 : index
    %1 = vector.load %arg1[%c0_1, %c0_2] : memref<1x16xf32, #tpu.memory_space<vmem>>, vector<1x16xf32>
    %c0_3 = arith.constant 0 : index
    %c0_4 = arith.constant 0 : index
    %2 = vector.load %arg3[%c0_3, %c0_4] : memref<3x8xf32, #tpu.memory_space<vmem>>, vector<1x8xf32>
    %c1 = arith.constant 1 : index
    %c0_5 = arith.constant 0 : index
    %3 = vector.load %arg3[%c1, %c0_5] : memref<3x8xf32, #tpu.memory_space<vmem>>, vector<1x8xf32>
    %c2 = arith.constant 2 : index
    %c0_6 = arith.constant 0 : index
    %4 = vector.load %arg3[%c2, %c0_6] : memref<3x8xf32, #tpu.memory_space<vmem>>, vector<1x1xf32>
    %c0_7 = arith.constant 0 : index
    %c0_8 = arith.constant 0 : index
    %5 = vector.load %arg2[%c0_7, %c0_8] : memref<32x8xf32, #tpu.memory_space<vmem>>, vector<32x8xf32>
    %cst = arith.constant dense<0.000000e+00> : vector<16x8xf32>
    %6 = tpu.matmul %0, %5, %cst {dimension_numbers = #tpu.dot_dimension_numbers<[1], [0], [0], [1], [0, 0, 1, 1], [], []>} : vector<16x32xf32>, vector<32x8xf32>, vector<16x8xf32> -> vector<16x8xf32>
    %7 = vector.broadcast %2 : vector<1x8xf32> to vector<16x8xf32>
    %8 = arith.addf %6, %7 : vector<16x8xf32>
    %cst_9 = arith.constant 0.000000e+00 : f32
    %9 = vector.broadcast %cst_9 : f32 to vector<16x8xf32>
    %10 = arith.maximumf %8, %9 : vector<16x8xf32>
    "tpu.trace_start"() <{level = 10 : i32, message = "oc,sc->os"}> : () -> ()
    %cst_10 = arith.constant dense<0.000000e+00> : vector<1x16xf32>
    %11 = tpu.matmul %3, %10, %cst_10 {dimension_numbers = #tpu.dot_dimension_numbers<[1], [1], [0], [0], [0, 0, 1, 0], [], []>} : vector<1x8xf32>, vector<16x8xf32>, vector<1x16xf32> -> vector<1x16xf32>
    "tpu.trace_stop"() : () -> ()
    %12 = vector.broadcast %4 : vector<1x1xf32> to vector<1x16xf32>
    %13 = arith.addf %11, %12 : vector<1x16xf32>
    %cst_11 = arith.constant 5.000000e-01 : f32
    %14 = vector.broadcast %cst_11 : f32 to vector<1x16xf32>
    %15 = arith.cmpf ogt, %1, %14 : vector<1x16xf32>
    %cst_12 = arith.constant 0xFF800000 : f32
    %16 = vector.broadcast %cst_12 : f32 to vector<1x16xf32>
    %17 = arith.select %15, %16, %13 : vector<1x16xi1>, vector<1x16xf32>
    %c0_13 = arith.constant 0 : index
    %c0_14 = arith.constant 0 : index
    %18 = vector.load %arg4[%c0_13, %c0_14] : memref<1x16xf32, #tpu.memory_space<vmem>>, vector<1x16xf32>
    tpu.vector_store %arg4[%c0_13, %c0_14], %17 {strides = array<i32>} : memref<1x16xf32, #tpu.memory_space<vmem>>, vector<1x16xf32>,
    return
  }
}

</mosaic_0001>

<llo_original>
// kernel: tpu_custom_call.1
$region0: #{tpu_custom_call.1}
  #allocation0 [shape = 'u32[]', space=smem, size = 0x4, offset = 0x4, fixed_abs, tag = 'smem constant byte address 0x4 - core index']
  #allocation1 [shape = 'u32[144,128]{1,0:T(1,128)}', space=vmem, size = 0x12000, scoped, tag = 'internal scratch']
  %s0 = inlined_call_operand.vmem [shape: f32[16,32], index: 0, kind: input, shape index: {}]
  %s1 = inlined_call_operand.vmem [shape: f32[1,16], index: 1, kind: input, shape index: {}]
  %s2 = inlined_call_operand.vmem [shape: f32[32,8], index: 2, kind: input, shape index: {}]
  %s3 = inlined_call_operand.vmem [shape: f32[3,8], index: 3, kind: input, shape index: {}]
  %s4 = inlined_call_operand.hbm [shape: f32[1,16], index: 4, kind: output, shape index: {}]
  %s5 = sld [smem:[#allocation0]]
  $region26: #{tpu_custom_call.1} parent=0
    _
  %s7 = ssub.s32 1, %s5
  %s8 = scalar_select 0, %s7, %s5
  $region1: #{tpu_custom_call.1} parent=0
    #allocation2 [shape = 'u8[512]{0}', space=vmem, size = 0x400, scoped, tag = 'output window, operand 0, single buffered']
    #allocation3 [shape = 's32[1]{0}', space=sflag, size = 0x4, scoped, tag = 'scoped memory for tpu_custom_call.1']
    %9 = vsyncpa [#allocation3], 0
    // Predicated region
    $region2: #{tpu_custom_call.1} parent=1 // pred_check
      _
    $region3: #{tpu_custom_call.1} parent=1 // pred_check_branch
      %11 = sbr.rel (0) target = $region5
    $region4: #{tpu_custom_call.1} parent=1 // pred_region
      _
    $region5: #{tpu_custom_call.1} parent=1 // pred_fallthru
      _
    // Predicated region
    $region6: #{tpu_custom_call.1} parent=1 // pred_check
      _
    $region7: #{tpu_custom_call.1} parent=1 // pred_check_branch
      %13 = sbr.rel (0) target = $region9
    $region8: #{tpu_custom_call.1} parent=1 // pred_region
      _
    $region9: #{tpu_custom_call.1} parent=1 // pred_fallthru
      _
    // Predicated region
    $region10: #{tpu_custom_call.1} parent=1 // pred_check
      _
    $region11: #{tpu_custom_call.1} parent=1 // pred_check_branch
      %15 = sbr.rel (0) target = $region13
    $region12: #{tpu_custom_call.1} parent=1 // pred_region
      _
    $region13: #{tpu_custom_call.1} parent=1 // pred_fallthru
      _
    // Predicated region
    $region14: #{tpu_custom_call.1} parent=1 // pred_check
      _
    $region15: #{tpu_custom_call.1} parent=1 // pred_check_branch
      %17 = sbr.rel (0) target = $region17
    $region16: #{tpu_custom_call.1} parent=1 // pred_region
      _
    $region17: #{tpu_custom_call.1} parent=1 // pred_fallthru
      _
    %v18 = vld [vmem:[%s0] sm:$0xff]
    %v19 = vld [vmem:[%s0 + $0x8] sm:$0xff]
    %v20 = vld [vmem:[%s1] sm:$0x1]
    %v21 = vld [vmem:[%s3] sm:$0x1]
    %v22 = vld [vmem:[%s3 + $0x1] sm:$0x1]
    %v23 = vld [vmem:[%s3 + $0x2] sm:$0x1]
    %v24 = vld [vmem:[%s2] sm:$0xff]
    %v25 = vld [vmem:[%s2 + $0x8] sm:$0xff]
    %v26 = vld [vmem:[%s2 + $0x10] sm:$0xff]
    %v27 = vld [vmem:[%s2 + $0x18] sm:$0xff]
    %v28 = vlaneseq
    %v29 = vshrl.u32 %v28, 7
    %v30 = vsub.s32 0, %v29
    %v31 = vrot.slane %v21, %v30
    %vm32 = vcmask 261120
    %v34 = vsel %vm32, %v18, 0
    %v37 = vsel %vm32, %v19, 0
    %39 = vmatprep.subr.mxu0 0.0
    %40 = vmatpush1.msra.mxu0 %v24
    %41 = vmatprep.subr.mxu0 0.0
    %42 = vmatpush1.msra.mxu0 %v25
    %43 = vmatprep.subr.mxu0 0.0
    %44 = vmatpush1.msra.mxu0 %v26
    %45 = vmatprep.subr.mxu0 0.0
    %46 = vmatpush1.msra.mxu0 %v27
    %47 = vmatprep.subr.mxu0 0.0
    %48 = vmatpush1.msra.mxu0 0.0
    %49 = vmatprep.subr.mxu0 0.0
    %50 = vmatpush1.msra.mxu0 0.0
    %51 = vmatprep.subr.mxu0 0.0
    %52 = vmatpush1.msra.mxu0 0.0
    %53 = vmatprep.subr.mxu0 0.0
    %54 = vmatpush1.msra.mxu0 0.0
    %55 = vmatprep.subr.mxu0 0.0
    %56 = vmatpush1.msra.mxu0 0.0
    %57 = vmatprep.subr.mxu0 0.0
    %58 = vmatpush1.msra.mxu0 0.0
    %59 = vmatprep.subr.mxu0 0.0
    %60 = vmatpush1.msra.mxu0 0.0
    %61 = vmatprep.subr.mxu0 0.0
    %62 = vmatpush1.msra.mxu0 0.0
    %63 = vmatprep.subr.mxu0 0.0
    %64 = vmatpush1.msra.mxu0 0.0
    %65 = vmatprep.subr.mxu0 0.0
    %66 = vmatpush1.msra.mxu0 0.0
    %67 = vmatprep.subr.mxu0 0.0
    %68 = vmatpush1.msra.mxu0 0.0
    %69 = vmatprep.subr.mxu0 0.0
    %70 = vmatpush1.msra.mxu0 0.0
    %71 = vmatprep.subr.mxu0 0.0
    %72 = vmatpush1.msra.mxu0 0.0
    %73 = vmatprep.subr.mxu0 0.0
    %74 = vmatpush1.msra.mxu0 0.0
    %75 = vmatprep.subr.mxu0 0.0
    %76 = vmatpush1.msra.mxu0 0.0
    %77 = vmatprep.subr.mxu0 0.0
    %78 = vmatpush1.msra.mxu0 0.0
    %79 = vmatprep.subr.mxu0 0.0
    %80 = vmatpush1.msra.mxu0 0.0
    %81 = vmatprep.subr.mxu0 0.0
    %82 = vmatpush1.msra.mxu0 0.0
    %83 = vmatprep.subr.mxu0 0.0
    %84 = vmatpush1.msra.mxu0 0.0
    %85 = vmatprep.subr.mxu0 0.0
    %86 = vmatpush1.msra.mxu0 0.0
    %87 = vmatprep.subr.mxu0 0.0
    %88 = vmatpush1.msra.mxu0 0.0
    %89 = vmatprep.subr.mxu0 0.0
    %90 = vmatpush1.msra.mxu0 0.0
    %91 = vmatprep.subr.mxu0 0.0
    %92 = vmatpush1.msra.mxu0 0.0
    %93 = vmatprep.subr.mxu0 0.0
    %94 = vmatpush1.msra.mxu0 0.0
    %95 = vmatprep.subr.mxu0 0.0
    %96 = vmatpush1.msra.mxu0 0.0
    %97 = vmatprep.subr.mxu0 0.0
    %98 = vmatpush1.msra.mxu0 0.0
    %99 = vmatprep.subr.mxu0 0.0
    %100 = vmatpush1.msra.mxu0 0.0
    %101 = vmatprep.subr.mxu0 0.0
    %102 = vmatpush1.msra.mxu0 0.0
    %103 = vmatprep.mubr.f32.mxu0 0.0
    %104 = vmatmul.mubr.f32.gmra.mrb[0].mxu0 %v34
    %v105 = vpop.f32.mrb[0].mxu0
    %v106 = vadd.f32 %v31, %v105
    %v107 = vpop.f32.mrb[0].mxu0
    %108 = vmatprep.mubr.f32.mxu0 0.0
    %109 = vmatmul.mubr.f32.gmra.mrb[0].mxu0 %v37
    %v110 = vpop.f32.mrb[0].mxu0
    %v111 = vadd.f32 %v31, %v110
    %v112 = vpop.f32.mrb[0].mxu0
    %113 = vdwg.mxu0
    %v114 = vmax.f32 %v106, 0.0
    %v115 = vmax.f32 %v111, 0.0
    %117 = vset.pattern.permute.xlu0 0
    %118 = vperm.xlu0 %117, %v23
    %v119 = vpop.permute.xlu0 %118
    %vm121 = vcmask 64512
    %v123 = vsel %vm121, %v22, 0
    %v126 = vsel %vm121, %v114, 0
    %v129 = vsel %vm121, %v115, 0
    %131 = vmatprep.subr.mxu0 0.0
    %132 = vmatpush1.xpose.msra.mxu0 %v126
    %133 = vmatprep.subr.mxu0 0.0
    %134 = vmatpush1.xpose.msra.mxu0 %v129
    %135 = vmatprep.subr.mxu0 0.0
    %136 = vmatpush1.xpose.msra.mxu0 0.0
    %137 = vmatprep.subr.mxu0 0.0
    %138 = vmatpush1.xpose.msra.mxu0 0.0
    %139 = vmatprep.subr.mxu0 0.0
    %140 = vmatpush1.xpose.msra.mxu0 0.0
    %141 = vmatprep.subr.mxu0 0.0
    %142 = vmatpush1.xpose.msra.mxu0 0.0
    %143 = vmatprep.subr.mxu0 0.0
    %144 = vmatpush1.xpose.msra.mxu0 0.0
    %145 = vmatprep.subr.mxu0 0.0
    %146 = vmatpush1.xpose.msra.mxu0 0.0
    %147 = vmatprep.subr.mxu0 0.0
    %148 = vmatpush1.xpose.msra.mxu0 0.0
    %149 = vmatprep.subr.mxu0 0.0
    %150 = vmatpush1.xpose.msra.mxu0 0.0
    %151 = vmatprep.subr.mxu0 0.0
    %152 = vmatpush1.xpose.msra.mxu0 0.0
    %153 = vmatprep.subr.mxu0 0.0
    %154 = vmatpush1.xpose.msra.mxu0 0.0
    %155 = vmatprep.subr.mxu0 0.0
    %156 = vmatpush1.xpose.msra.mxu0 0.0
    %157 = vmatprep.subr.mxu0 0.0
    %158 = vmatpush1.xpose.msra.mxu0 0.0
    %159 = vmatprep.subr.mxu0 0.0
    %160 = vmatpush1.xpose.msra.mxu0 0.0
    %161 = vmatprep.subr.mxu0 0.0
    %162 = vmatpush1.xpose.msra.mxu0 0.0
    %163 = vmatprep.subr.mxu0 0.0
    %164 = vmatpush1.xpose.msra.mxu0 0.0
    %165 = vmatprep.subr.mxu0 0.0
    %166 = vmatpush1.xpose.msra.mxu0 0.0
    %167 = vmatprep.subr.mxu0 0.0
    %168 = vmatpush1.xpose.msra.mxu0 0.0
    %169 = vmatprep.subr.mxu0 0.0
    %170 = vmatpush1.xpose.msra.mxu0 0.0
    %171 = vmatprep.subr.mxu0 0.0
    %172 = vmatpush1.xpose.msra.mxu0 0.0
    %173 = vmatprep.subr.mxu0 0.0
    %174 = vmatpush1.xpose.msra.mxu0 0.0
    %175 = vmatprep.subr.mxu0 0.0
    %176 = vmatpush1.xpose.msra.mxu0 0.0
    %177 = vmatprep.subr.mxu0 0.0
    %178 = vmatpush1.xpose.msra.mxu0 0.0
    %179 = vmatprep.subr.mxu0 0.0
    %180 = vmatpush1.xpose.msra.mxu0 0.0
    %181 = vmatprep.subr.mxu0 0.0
    %182 = vmatpush1.xpose.msra.mxu0 0.0
    %183 = vmatprep.subr.mxu0 0.0
    %184 = vmatpush1.xpose.msra.mxu0 0.0
    %185 = vmatprep.subr.mxu0 0.0
    %186 = vmatpush1.xpose.msra.mxu0 0.0
    %187 = vmatprep.subr.mxu0 0.0
    %188 = vmatpush1.xpose.msra.mxu0 0.0
    %189 = vmatprep.subr.mxu0 0.0
    %190 = vmatpush1.xpose.msra.mxu0 0.0
    %191 = vmatprep.subr.mxu0 0.0
    %192 = vmatpush1.xpose.msra.mxu0 0.0
    %193 = vmatprep.subr.mxu0 0.0
    %194 = vmatpush1.xpose.msra.mxu0 0.0
    %195 = vmatprep.mubr.f32.mxu0 0.0
    %196 = vmatmul.mubr.f32.gmra.mrb[0].mxu0 %v123
    %v197 = vpop.f32.mrb[0].mxu0
    %v198 = vadd.f32 %v119, %v197
    %v199 = vpop.f32.mrb[0].mxu0
    %200 = vdwg.mxu0
    %vm201 = vcmp.gt.f32.partialorder %v20, 0.5
    %v202 = vsel %vm201, -inf, %v198
    %vm203 = vcmask 122880
    %204 = vst.msk [vmem:[#allocation2] sm:$0x1] %vm203, %v202
    // Predicated region
    $region18: #{tpu_custom_call.1} parent=1 // pred_check
      _
    $region19: #{tpu_custom_call.1} parent=1 // pred_check_branch
      %206 = sbr.rel (0) target = $region21
    $region20: #{tpu_custom_call.1} parent=1 // pred_region
      %s208 = ssub.s32 16, 16
      %209 = vsyncadd [#allocation3], %s208
      %s211 = sshll.u32 [#allocation2], 4
      %s212 = int_to_ptr.vmem [resolvable:$true] %s211
      %214 = dma.vmem_to_hbm [thread:$0]  %s212, 16, %s4, [#allocation3]
    $region21: #{tpu_custom_call.1} parent=1 // pred_fallthru
      _
    // Predicated region
    $region22: #{tpu_custom_call.1} parent=1 // pred_check
      _
    $region23: #{tpu_custom_call.1} parent=1 // pred_check_branch
      %216 = sbr.rel (0) target = $region25
    $region24: #{tpu_custom_call.1} parent=1 // pred_region
      %217 = dma.done [#allocation3], 16
    $region25: #{tpu_custom_call.1} parent=1 // pred_fallthru
      _
    %218 = vsyncpa [#allocation3], 1

</llo_original>
